<compile_context>
chip_gen: v7x
topology: tpu7x:2x2x1
jax: 0.10.0
libtpu: 0.0.40
codegen_flags: <defaults>
</compile_context>

<pallas_src>
import functools

import jax
import jax.numpy as jnp
from jax.experimental import pallas as pl
from jax.experimental.pallas import tpu as pltpu


def _lse_kernel(logits_ref, lse_ref, m_scr, l_scr, *, c_total, tile_c, mask_c):
    """Streaming per-row logsumexp over the class (last, lane) axis."""
    k = pl.program_id(1)           # class-tile index (reduction axis, last)
    nk = pl.num_programs(1)

    # ---- init per-row online-logsumexp state at the start of each row tile ----
    @pl.when(k == 0)
    def _():
        m_scr[...] = jnp.full_like(m_scr, -jnp.inf)
        l_scr[...] = jnp.zeros_like(l_scr)

    logits = logits_ref[...].astype(jnp.float32)            # (tile_n, tile_c)

    if mask_c:
        # Only needed when C % tile_c != 0.  Tile-local iota vs a scalar limit;
        # for non-final class tiles limit >= tile_c so the select is a no-op.
        local_col = jax.lax.broadcasted_iota(jnp.int32, logits.shape, 1)
        limit = c_total - k * tile_c
        logits = jnp.where(local_col < limit, logits, -jnp.inf)

    # Online (streaming) logsumexp update.
    m_prev = m_scr[...]                                      # (tile_n, 1)
    m_new = jnp.maximum(m_prev, jnp.max(logits, axis=-1, keepdims=True))
    alpha = jnp.exp(m_prev - m_new)
    p = jnp.exp(logits - m_new)
    l_scr[...] = alpha * l_scr[...] + jnp.sum(p, axis=-1, keepdims=True)
    m_scr[...] = m_new

    # ---- finalize this row tile: per-sample logsumexp ----
    # Padded rows of a partial last N tile may hold garbage/NaN, but the
    # partial output block is clipped on writeback, so they never reach HBM.
    @pl.when(k == nk - 1)
    def _():
        lse_ref[...] = m_scr[...] + jnp.log(l_scr[...])


def cross_entropy(y_pred: jax.Array, y_true: jax.Array,
                  *, tile_n: int = 512, tile_c: int = 2048) -> jax.Array:
    """Equivalent of torch.nn.CrossEntropyLoss()(y_pred, y_true).

    y_pred: (N, C) float logits (f32 or bf16; streamed at native dtype)
    y_true: (N,)   int class indices (assumed valid, i.e. in [0, C))
    returns: scalar float32 mean loss
    """
    n, c = y_pred.shape
    # Tile sizes: either the full dim (small problems) or an (8,128)-aligned tile.
    tn = n if n <= tile_n else tile_n        # tile_n default is a multiple of 8
    tc = c if c <= tile_c else tile_c        # tile_c default is a multiple of 128
    grid = (pl.cdiv(n, tn), pl.cdiv(c, tc))  # reduction (class) axis last

    mask_c = (c % tc) != 0                   # trace-time: skip mask when divisible

    kernel = functools.partial(_lse_kernel, c_total=c, tile_c=tc, mask_c=mask_c)

    itemsize = jnp.dtype(y_pred.dtype).itemsize
    cost = pl.CostEstimate(
        flops=5 * n * c,                      # max/sub/sum + mask-ish per element
        transcendentals=n * c,                # one exp per element
        bytes_accessed=n * c * itemsize + n * 4)

    lse = pl.pallas_call(
        kernel,
        out_shape=jax.ShapeDtypeStruct((n, 1), jnp.float32),
        grid=grid,
        in_specs=[pl.BlockSpec((tn, tc), lambda i, k: (i, k))],
        out_specs=pl.BlockSpec((tn, 1), lambda i, k: (i, 0)),
        scratch_shapes=[
            pltpu.VMEM((tn, 1), jnp.float32),   # running max    m
            pltpu.VMEM((tn, 1), jnp.float32),   # running sumexp l
        ],
        compiler_params=pltpu.CompilerParams(
            # Batch-tile axis is independent (output block varies with i) ->
            # "parallel" lets v7x megacore shard it across both TensorCores.
            # Class axis is the streamed reduction -> "arbitrary", kept last.
            dimension_semantics=("parallel", "arbitrary"),
        ),
        cost_estimate=cost,
    )(y_pred)

    # Cheap parts in XLA: gather the true-class logit (N elements) and the mean.
    picked = jnp.take_along_axis(
        y_pred, y_true.astype(jnp.int32)[:, None], axis=-1).astype(jnp.float32)
    return jnp.mean(lse - picked)


def _reference(y_pred, y_true):
    yp = y_pred.astype(jnp.float32)
    return jnp.mean(
        jax.nn.logsumexp(yp, axis=-1)
        - jnp.take_along_axis(yp, y_true[:, None], axis=-1)[:, 0])


if __name__ == "__main__":
    key = jax.random.PRNGKey(0)
    k1, k2, k3, k4, k5, k6 = jax.random.split(key, 6)

    # Small shapes consistent with the module: batch=8 logits over 32 classes.
    batch, num_classes = 8, 32
    y_pred = jax.random.normal(k1, (batch, num_classes), dtype=jnp.float32)
    y_true = jax.random.randint(k2, (batch,), 0, num_classes, dtype=jnp.int32)

    loss = cross_entropy(y_pred, y_true)
    jax.block_until_ready(loss)
    ref = _reference(y_pred, y_true)
    assert jnp.allclose(loss, ref, atol=1e-5, rtol=1e-5), (loss, ref)

    # Tiled path with partial N tile (1040 = 2*512 + 16) and partial C tile
    # (2500 = 2048 + 452): exercises the C-boundary mask and clipped writeback.
    n2, c2 = 1040, 2500
    yp2 = jax.random.normal(k3, (n2, c2), dtype=jnp.float32)
    yt2 = jax.random.randint(k4, (n2,), 0, c2, dtype=jnp.int32)
    loss2 = cross_entropy(yp2, yt2)
    jax.block_until_ready(loss2)
    ref2 = _reference(yp2, yt2)
    assert jnp.allclose(loss2, ref2, atol=1e-4, rtol=1e-4), (loss2, ref2)

    # bf16 logits path (native-dtype streaming, in-kernel f32 cast).
    n3, c3 = 520, 2100
    yp3 = jax.random.normal(k5, (n3, c3), dtype=jnp.bfloat16)
    yt3 = jax.random.randint(k6, (n3,), 0, c3, dtype=jnp.int32)
    loss3 = cross_entropy(yp3, yt3)
    jax.block_until_ready(loss3)
    ref3 = _reference(yp3, yt3)
    assert jnp.allclose(loss3, ref3, atol=1e-3, rtol=1e-3), (loss3, ref3)

    # TODO(synk): torch's ignore_index=-100 / class weights / label smoothing are
    # not implemented; defaults with valid labels match exactly.
    print("KERNEL_OK")
</pallas_src>

<mosaic_0001>
module attributes {stable_mosaic.version = 11 : i64} {
  func.func @_lse_kernel(%arg0: i32, %arg1: i32, %arg2: memref<8x32xf32, #tpu.memory_space<vmem>>, %arg3: memref<8x1xf32, #tpu.memory_space<vmem>>, %arg4: memref<8x1xf32, #tpu.memory_space<vmem>>, %arg5: memref<8x1xf32, #tpu.memory_space<vmem>>) attributes {dimension_semantics = [#tpu.dimension_semantics<parallel>, #tpu.dimension_semantics<arbitrary>], iteration_bounds = array<i64: 1, 1>, scalar_prefetch = 0 : i64, scratch_operands = 2 : i64, tpu.core_type = #tpu.core_type<tc>, window_params = [{transform_indices = @transform_0, window_bounds = array<i64: 8, 32>}, {transform_indices = @transform_1, window_bounds = array<i64: 8, 1>}]} {
    %c0_i32 = arith.constant 0 : i32
    %0 = arith.cmpi eq, %arg1, %c0_i32 : i32
    %1 = arith.extui %0 : i1 to i32
    %c0_i32_0 = arith.constant 0 : i32
    %2 = arith.cmpi ne, %1, %c0_i32_0 : i32
    scf.if %2 {
      %cst_13 = arith.constant 0xFF800000 : f32
      %23 = vector.broadcast %cst_13 : f32 to vector<8x1xf32>
      %c0_14 = arith.constant 0 : index
      %c0_15 = arith.constant 0 : index
      %24 = vector.load %arg4[%c0_14, %c0_15] : memref<8x1xf32, #tpu.memory_space<vmem>>, vector<8x1xf32>
      tpu.vector_store %arg4[%c0_14, %c0_15], %23 {strides = array<i32>} : memref<8x1xf32, #tpu.memory_space<vmem>>, vector<8x1xf32>,
      %cst_16 = arith.constant 0.000000e+00 : f32
      %25 = vector.broadcast %cst_16 : f32 to vector<8x1xf32>
      %c0_17 = arith.constant 0 : index
      %c0_18 = arith.constant 0 : index
      %26 = vector.load %arg5[%c0_17, %c0_18] : memref<8x1xf32, #tpu.memory_space<vmem>>, vector<8x1xf32>
      tpu.vector_store %arg5[%c0_17, %c0_18], %25 {strides = array<i32>} : memref<8x1xf32, #tpu.memory_space<vmem>>, vector<8x1xf32>,
    } else {
    }
    %c0 = arith.constant 0 : index
    %c0_1 = arith.constant 0 : index
    %3 = vector.load %arg2[%c0, %c0_1] : memref<8x32xf32, #tpu.memory_space<vmem>>, vector<8x32xf32>
    %c0_2 = arith.constant 0 : index
    %c0_3 = arith.constant 0 : index
    %4 = vector.load %arg4[%c0_2, %c0_3] : memref<8x1xf32, #tpu.memory_space<vmem>>, vector<8x1xf32>
    %cst = arith.constant dense<0xFF800000> : vector<8xf32>
    %5 = vector.multi_reduction <maximumf>, %3, %cst [1] : vector<8x32xf32> to vector<8xf32>
    %6 = vector.shape_cast %5 : vector<8xf32> to vector<8x1xf32>
    %7 = arith.maximumf %4, %6 : vector<8x1xf32>
    %8 = arith.subf %4, %7 : vector<8x1xf32>
    %9 = math.exp %8 : vector<8x1xf32>
    %10 = vector.broadcast %7 : vector<8x1xf32> to vector<8x32xf32>
    %11 = arith.subf %3, %10 : vector<8x32xf32>
    %12 = math.exp %11 : vector<8x32xf32>
    %c0_4 = arith.constant 0 : index
    %c0_5 = arith.constant 0 : index
    %13 = vector.load %arg5[%c0_4, %c0_5] : memref<8x1xf32, #tpu.memory_space<vmem>>, vector<8x1xf32>
    %14 = arith.mulf %9, %13 : vector<8x1xf32>
    %cst_6 = arith.constant dense<0.000000e+00> : vector<8xf32>
    %15 = vector.multi_reduction <add>, %12, %cst_6 [1] : vector<8x32xf32> to vector<8xf32>
    %16 = vector.shape_cast %15 : vector<8xf32> to vector<8x1xf32>
    %17 = arith.addf %14, %16 : vector<8x1xf32>
    %c0_7 = arith.constant 0 : index
    %c0_8 = arith.constant 0 : index
    %18 = vector.load %arg5[%c0_7, %c0_8] : memref<8x1xf32, #tpu.memory_space<vmem>>, vector<8x1xf32>
    tpu.vector_store %arg5[%c0_7, %c0_8], %17 {strides = array<i32>} : memref<8x1xf32, #tpu.memory_space<vmem>>, vector<8x1xf32>,
    %c0_9 = arith.constant 0 : index
    %c0_10 = arith.constant 0 : index
    %19 = vector.load %arg4[%c0_9, %c0_10] : memref<8x1xf32, #tpu.memory_space<vmem>>, vector<8x1xf32>
    tpu.vector_store %arg4[%c0_9, %c0_10], %7 {strides = array<i32>} : memref<8x1xf32, #tpu.memory_space<vmem>>, vector<8x1xf32>,
    %c0_i32_11 = arith.constant 0 : i32
    %20 = arith.cmpi eq, %arg1, %c0_i32_11 : i32
    %21 = arith.extui %20 : i1 to i32
    %c0_i32_12 = arith.constant 0 : i32
    %22 = arith.cmpi ne, %21, %c0_i32_12 : i32
    scf.if %22 {
      %c0_13 = arith.constant 0 : index
      %c0_14 = arith.constant 0 : index
      %23 = vector.load %arg4[%c0_13, %c0_14] : memref<8x1xf32, #tpu.memory_space<vmem>>, vector<8x1xf32>
      %c0_15 = arith.constant 0 : index
      %c0_16 = arith.constant 0 : index
      %24 = vector.load %arg5[%c0_15, %c0_16] : memref<8x1xf32, #tpu.memory_space<vmem>>, vector<8x1xf32>
      %25 = math.log %24 : vector<8x1xf32>
      %26 = arith.addf %23, %25 : vector<8x1xf32>
      %c0_17 = arith.constant 0 : index
      %c0_18 = arith.constant 0 : index
      %27 = vector.load %arg3[%c0_17, %c0_18] : memref<8x1xf32, #tpu.memory_space<vmem>>, vector<8x1xf32>
      tpu.vector_store %arg3[%c0_17, %c0_18], %26 {strides = array<i32>} : memref<8x1xf32, #tpu.memory_space<vmem>>, vector<8x1xf32>,
    } else {
    }
    return
  }
  func.func @transform_0(%arg0: i32, %arg1: i32) -> (i32, i32) {
    %c0_i32 = arith.constant 0 : i32
    return %arg0, %arg1 : i32, i32
  }
  func.func @transform_1(%arg0: i32, %arg1: i32) -> (i32, i32) {
    %c0_i32 = arith.constant 0 : i32
    %c0_i32_0 = arith.constant 0 : i32
    return %arg0, %c0_i32 : i32, i32
  }
}

</mosaic_0001>

<llo_original>
// kernel: tpu_custom_call.1
$region0: #{tpu_custom_call.1}
  #allocation0 [shape = 'u32[]', space=smem, size = 0x4, offset = 0x4, fixed_abs, tag = 'smem constant byte address 0x4 - core index']
  #allocation1 [shape = 'u32[144,128]{1,0:T(1,128)}', space=vmem, size = 0x12000, scoped, tag = 'internal scratch']
  #allocation2 [shape = 'f32[8,1]{1,0:T(8,128)}', space=vmem, size = 0x1000, scoped, tag = 'scratch operand']
  #allocation3 [shape = 'f32[8,1]{1,0:T(8,128)}', space=vmem, size = 0x1000, scoped, tag = 'scratch operand']
  %s0 = inlined_call_operand.hbm [shape: f32[8,32], index: 0, kind: input, shape index: {}]
  %s1 = inlined_call_operand.vmem [shape: f32[8,1], index: 1, kind: output, shape index: {}]
  %s2 = sld [smem:[#allocation0]]
  $region26: #{tpu_custom_call.1} parent=0
    _
  %s4 = ssub.s32 1, %s2
  %s5 = scalar_select 0, %s4, %s2
  $region1: #{tpu_custom_call.1} parent=0
    #allocation4 [shape = 'u8[4096]{0}', space=vmem, size = 0x1000, scoped, tag = 'input window, operand 0, single buffered']
    #allocation5 [shape = 's32[1]{0}', space=sflag, size = 0x4, scoped, tag = 'scoped memory for tpu_custom_call.1']
    %6 = vsyncpa [#allocation5], 0
    // Predicated region
    $region2: #{tpu_custom_call.1} parent=1 // pred_check
      _
    $region3: #{tpu_custom_call.1} parent=1 // pred_check_branch
      %8 = sbr.rel (0) target = $region5
    $region4: #{tpu_custom_call.1} parent=1 // pred_region
      %s10 = ssub.s32 128, 128
      %11 = vsyncadd [#allocation5], %s10
      %s13 = sshll.u32 [#allocation4], 4
      %s14 = int_to_ptr.vmem [resolvable:$true] %s13
      %16 = dma.hbm_to_vmem [thread:$0]  %s0, 128, %s14, [#allocation5]
    $region5: #{tpu_custom_call.1} parent=1 // pred_fallthru
      _
    // Predicated region
    $region6: #{tpu_custom_call.1} parent=1 // pred_check
      _
    $region7: #{tpu_custom_call.1} parent=1 // pred_check_branch
      %18 = sbr.rel (0) target = $region9
    $region8: #{tpu_custom_call.1} parent=1 // pred_region
      %19 = dma.done [#allocation5], 128
    $region9: #{tpu_custom_call.1} parent=1 // pred_fallthru
      _
    %p20 = scmp.eq.s32.totalorder 0, 0
    // Predicated region
    $region10: #{tpu_custom_call.1} parent=1 // pred_check
      %p21 = pneg %p20
    $region11: #{tpu_custom_call.1} parent=1 // pred_check_branch
      %23 = sbr.rel (%p21) target = $region13
    $region12: #{tpu_custom_call.1} parent=1 // pred_region
      %vm24 = vcmask 7168
      %25 = vst.msk [vmem:[#allocation2] sm:$0xff] %vm24, -inf
      %26 = vst.msk [vmem:[#allocation3] sm:$0xff] %vm24, 0.0
    $region13: #{tpu_custom_call.1} parent=1 // pred_fallthru
      _
    %v27 = vld [vmem:[#allocation4] sm:$0xff]
    %v28 = vld [vmem:[#allocation2] sm:$0xff]
    %vm29 = vcmask 261120
    %v30 = vsel %vm29, %v27, -inf
    %31 = vmax.xlane.f32.xlu0 %v30
    %v32 = vpop.xlane.xlu0 %31
    %v33 = vmax.f32 %v28, %v32
    %v34 = vsub.f32 %v28, %v33
    %v35 = vmul.f32 %v34, 1.442695
    %v36 = vpow.pop %v35
    %38 = vset.pattern.permute.xlu0 0
    %39 = vperm.xlu0 %38, %v33
    %v40 = vpop.permute.xlu0 %39
    %v42 = vsub.f32 %v27, %v40
    %v43 = vmul.f32 %v42, 1.442695
    %v44 = vpow.pop %v43
    %v45 = vld [vmem:[#allocation3] sm:$0xff]
    %v46 = vmul.f32 %v36, %v45
    %v47 = vsel %vm29, %v44, 0.0
    %48 = vadd.xlane.f32.xlu0 %v47
    %v49 = vpop.xlane.xlu0 %48
    %v50 = vadd.f32 %v46, %v49
    %vm51 = vcmask 7168
    %52 = vst.msk [vmem:[#allocation3] sm:$0xff] %vm51, %v50
    %53 = vst.msk [vmem:[#allocation2] sm:$0xff] %vm51, %v33
    // Predicated region
    $region14: #{tpu_custom_call.1} parent=1 // pred_check
      %p54 = pneg %p20
    $region15: #{tpu_custom_call.1} parent=1 // pred_check_branch
      %56 = sbr.rel (%p54) target = $region17
    $region16: #{tpu_custom_call.1} parent=1 // pred_region
      %v57 = vld [vmem:[#allocation2] sm:$0xff]
      %v58 = vld [vmem:[#allocation3] sm:$0xff]
      %v59 = vlog2.pop %v58
      %v60 = vmul.f32 %v59, 0.6931472
      %v61 = vadd.f32 %v57, %v60
      %62 = vst.msk [vmem:[%s1] sm:$0xff] %vm51, %v61
    $region17: #{tpu_custom_call.1} parent=1 // pred_fallthru
      _
    // Predicated region
    $region18: #{tpu_custom_call.1} parent=1 // pred_check
      _
    $region19: #{tpu_custom_call.1} parent=1 // pred_check_branch
      %64 = sbr.rel (0) target = $region21
    $region20: #{tpu_custom_call.1} parent=1 // pred_region
      _
    $region21: #{tpu_custom_call.1} parent=1 // pred_fallthru
      _
    // Predicated region
    $region22: #{tpu_custom_call.1} parent=1 // pred_check
      _
    $region23: #{tpu_custom_call.1} parent=1 // pred_check_branch
      %66 = sbr.rel (0) target = $region25
    $region24: #{tpu_custom_call.1} parent=1 // pred_region
      _
    $region25: #{tpu_custom_call.1} parent=1 // pred_fallthru
      _
    %67 = vsyncpa [#allocation5], 1

</llo_original>
